<compile_context>
chip_gen: v7x
topology: tpu7x:2x2x1
jax: 0.10.0
libtpu: 0.0.40
codegen_flags: <defaults>
</compile_context>

<pallas_src>
import functools

import jax
import jax.numpy as jnp
from jax.experimental import pallas as pl
from jax.experimental.pallas import tpu as pltpu

EPS = 1e-6


def _ipow(x, p_int):
    """x ** p_int via VPU multiplies (exponentiation by squaring)."""
    result = None
    base = x
    e = int(p_int)
    while e > 0:
        if e & 1:
            result = base if result is None else result * base
        base = base * base
        e >>= 1
    return result


def _store_result(r_col, o_ref):
    """Store per-row results; relayout to the output block's shape if needed.

    r_col: (tile_nc, 1) f32 per-row GeM values.
    o_ref: either (1, tile_nc) (lane-dense row layout) or (tile_nc, 1) (column
           fallback).  In the fallback case the reshape is a no-op.
    """
    if r_col.shape != o_ref.shape:
        r_col = r_col.reshape(o_ref.shape)
    o_ref[...] = r_col.astype(o_ref.dtype)


def _gem_kernel(p_ref, x_ref, o_ref):
    """Dynamic (learned, runtime) p.

    p_ref: SMEM (1,) f32 — the learned power parameter.
    x_ref: VMEM (tile_nc, HW) block.
    o_ref: VMEM (1, tile_nc) or (tile_nc, 1) block.
    """
    p = p_ref[0]
    inv_p = 1.0 / p  # exact scalar divide; approx reciprocal would bias the root

    x = x_ref[...].astype(jnp.float32)
    xc = jnp.maximum(x, EPS)                        # clamp(min=eps)
    y = jnp.exp(jnp.log(xc) * p)                    # x ** p   (EUP, f32)
    m = jnp.mean(y, axis=-1, keepdims=True)         # adaptive_avg_pool2d -> 1x1
    r = jnp.exp(jnp.log(m) * inv_p)                 # m ** (1/p), tiny (tile_nc, 1)
    _store_result(r, o_ref)


def _gem_kernel_static(x_ref, o_ref, *, p_int):
    """Compile-time integer p (e.g. the default p=3): no per-element EUP work."""
    x = x_ref[...].astype(jnp.float32)
    xc = jnp.maximum(x, EPS)
    y = _ipow(xc, p_int)                            # VPU multiplies only
    m = jnp.mean(y, axis=-1, keepdims=True)
    r = jnp.exp(jnp.log(m) * (1.0 / p_int))         # root on (tile_nc, 1) only
    _store_result(r, o_ref)


def _choose_tiling(nc, hw, itemsize):
    """Pick rows per block and whether the lane-dense row output is legal.

    Returns (tile_nc, row_out):
      * blocks target ~4 MiB of input, rows capped at 8192,
      * row output (block (1, tile_nc)) needs tile_nc % 128 == 0 or tile == nc,
      * for huge H*W planes fall back to 8-row blocks + column output.
    """
    target_bytes = 4 * 1024 * 1024
    rows = max(8, min(int(target_bytes // max(1, hw * itemsize)), 8192))
    if nc <= rows:
        return nc, True                      # full-dim blocks: always legal
    if rows >= 128:
        return (rows // 128) * 128, True     # lane-dense output block legal
    return (rows // 8) * 8, False            # huge rows: column output


def gem_pooling(x, p, *, static_p=None):
    """Generalized mean pooling with output_size=1.

    Args:
      x: (N, C, H, W) float array (NCHW, matching PyTorch).
      p: (1,) float array, the learned GeM power parameter.
      static_p: optional compile-time integer power. When given, the learned
        `p` is ignored and a VPU-only integer-power path is used.
    Returns:
      (N, C, 1, 1) array, same dtype as x.
    """
    n, c, h, w = x.shape
    nc, hw = n * c, h * w
    x2d = x.reshape(nc, hw)                  # free metadata reshape (contiguous)

    tile_nc, row_out = _choose_tiling(nc, hw, x.dtype.itemsize)
    grid = (pl.cdiv(nc, tile_nc),)
    x_spec = pl.BlockSpec((tile_nc, hw), lambda i: (i, 0))   # never tile HW
    cparams = pltpu.CompilerParams(
        dimension_semantics=("parallel",),   # megacore sharding on v7x
    )

    use_static = (static_p is not None
                  and float(static_p) == int(static_p)
                  and int(static_p) >= 1)

    def call(row_layout):
        if row_layout:
            out_shape = jax.ShapeDtypeStruct((1, nc), x.dtype)
            out_spec = pl.BlockSpec((1, tile_nc), lambda i: (0, i))
        else:
            out_shape = jax.ShapeDtypeStruct((nc, 1), x.dtype)
            out_spec = pl.BlockSpec((tile_nc, 1), lambda i: (i, 0))
        if use_static:
            kernel = functools.partial(_gem_kernel_static, p_int=int(static_p))
            in_specs = [x_spec]
            args = (x2d,)
        else:
            kernel = _gem_kernel
            in_specs = [pl.BlockSpec(memory_space=pltpu.SMEM),  # p in SMEM
                        x_spec]
            args = (p.astype(jnp.float32), x2d)
        return pl.pallas_call(
            kernel,
            out_shape=out_shape,
            grid=grid,
            in_specs=in_specs,
            out_specs=out_spec,
            compiler_params=cparams,
        )(*args)

    if row_out:
        try:
            out = call(True)
        except Exception:
            # Layout fallback (effective in eager mode): if the in-kernel
            # column->row relayout fails to lower, use the proven column
            # output layout.  Same math, only the writeback layout differs.
            out = call(False)
    else:
        out = call(False)

    return out.reshape(n, c, 1, 1)


def gem_reference(x, p):
    """Pure-JAX reference mirroring the PyTorch forward."""
    pv = p.reshape(())
    xc = jnp.maximum(x, EPS)                 # clamp(min=eps)
    y = xc ** pv
    m = jnp.mean(y, axis=(2, 3), keepdims=True)
    return m ** (1.0 / pv)


if __name__ == "__main__":
    key = jax.random.PRNGKey(0)
    k0, k1 = jax.random.split(key)

    # nn.Parameter(torch.ones(1) * norm), norm=3
    p = jnp.ones((1,), dtype=jnp.float32) * 3.0

    # --- Small shape matching the module's typical usage --------------------
    N, C, H, W = 2, 4, 16, 16
    x = jax.random.uniform(k0, (N, C, H, W), dtype=jnp.float32,
                           minval=-0.5, maxval=2.0)
    ref = gem_reference(x, p)

    # Dynamic (learned-p) path — matches the nn.Parameter semantics.
    out = jax.block_until_ready(gem_pooling(x, p))
    assert out.shape == (N, C, 1, 1), out.shape
    assert jnp.allclose(out, ref, rtol=1e-5, atol=1e-5), (
        float(jnp.max(jnp.abs(out - ref))))

    # Static integer-p fast path (default norm=3): VPU cube, no per-element EUP.
    out_s = jax.block_until_ready(gem_pooling(x, p, static_p=3))
    assert jnp.allclose(out_s, ref, rtol=1e-5, atol=1e-5), (
        float(jnp.max(jnp.abs(out_s - ref))))

    # --- Odd, non-aligned dims (full-dim blocks, masked lanes) --------------
    x2 = jax.random.uniform(k1, (3, 5, 7, 7), dtype=jnp.float32,
                            minval=-0.5, maxval=2.0)
    ref2 = gem_reference(x2, p)
    out2 = jax.block_until_ready(gem_pooling(x2, p))
    assert out2.shape == (3, 5, 1, 1), out2.shape
    assert jnp.allclose(out2, ref2, rtol=1e-5, atol=1e-5), (
        float(jnp.max(jnp.abs(out2 - ref2))))

    # --- Multi-block grid + partial last block (lane-dense masked writeback) -
    x3 = jax.random.uniform(k1, (2, 4500, 7, 7), dtype=jnp.float32,
                            minval=-0.5, maxval=2.0)          # nc=9000 > tile
    ref3 = gem_reference(x3, p)
    out3 = jax.block_until_ready(gem_pooling(x3, p))
    assert out3.shape == (2, 4500, 1, 1), out3.shape
    assert jnp.allclose(out3, ref3, rtol=5e-5, atol=5e-5), (
        float(jnp.max(jnp.abs(out3 - ref3))))

    print("KERNEL_OK")
</pallas_src>

<mosaic_0001>
module attributes {stable_mosaic.version = 11 : i64} {
  func.func @_gem_kernel(%arg0: i32, %arg1: memref<1xf32, #tpu.memory_space<smem>>, %arg2: memref<8x256xf32, #tpu.memory_space<vmem>>, %arg3: memref<1x8xf32, #tpu.memory_space<vmem>>) attributes {dimension_semantics = [#tpu.dimension_semantics<parallel>], iteration_bounds = array<i64: 1>, scalar_prefetch = 0 : i64, scratch_operands = 0 : i64, tpu.core_type = #tpu.core_type<tc>, window_params = [{transform_indices = @transform_0, window_bounds = array<i64: 1>}, {transform_indices = @transform_1, window_bounds = array<i64: 8, 256>}, {transform_indices = @transform_2, window_bounds = array<i64: 1, 8>}]} {
    %c0 = arith.constant 0 : index
    %0 = memref.load %arg1[%c0] : memref<1xf32, #tpu.memory_space<smem>>
    %cst = arith.constant 1.000000e+00 : f32
    %1 = arith.divf %cst, %0 : f32
    %c0_0 = arith.constant 0 : index
    %c0_1 = arith.constant 0 : index
    %2 = vector.load %arg2[%c0_0, %c0_1] : memref<8x256xf32, #tpu.memory_space<vmem>>, vector<8x256xf32>
    %cst_2 = arith.constant 9.99999997E-7 : f32
    %3 = vector.broadcast %cst_2 : f32 to vector<8x256xf32>
    %4 = arith.maximumf %2, %3 : vector<8x256xf32>
    %5 = math.log %4 : vector<8x256xf32>
    %6 = vector.broadcast %0 : f32 to vector<8x256xf32>
    %7 = arith.mulf %5, %6 : vector<8x256xf32>
    %8 = math.exp %7 : vector<8x256xf32>
    %cst_3 = arith.constant dense<0.000000e+00> : vector<8xf32>
    %9 = vector.multi_reduction <add>, %8, %cst_3 [1] : vector<8x256xf32> to vector<8xf32>
    %10 = vector.shape_cast %9 : vector<8xf32> to vector<8x1xf32>
    %cst_4 = arith.constant 2.560000e+02 : f32
    %11 = vector.broadcast %cst_4 : f32 to vector<8x1xf32>
    %12 = arith.divf %10, %11 : vector<8x1xf32>
    %13 = math.log %12 : vector<8x1xf32>
    %14 = vector.broadcast %1 : f32 to vector<8x1xf32>
    %15 = arith.mulf %13, %14 : vector<8x1xf32>
    %16 = math.exp %15 : vector<8x1xf32>
    %17 = vector.shape_cast %16 : vector<8x1xf32> to vector<1x8xf32>
    %c0_5 = arith.constant 0 : index
    %c0_6 = arith.constant 0 : index
    %18 = vector.load %arg3[%c0_5, %c0_6] : memref<1x8xf32, #tpu.memory_space<vmem>>, vector<1x8xf32>
    tpu.vector_store %arg3[%c0_5, %c0_6], %17 {strides = array<i32>} : memref<1x8xf32, #tpu.memory_space<vmem>>, vector<1x8xf32>,
    return
  }
  func.func @transform_0(%arg0: i32) -> i32 {
    %c0_i32 = arith.constant 0 : i32
    %c0_i32_0 = arith.constant 0 : i32
    return %c0_i32 : i32
  }
  func.func @transform_1(%arg0: i32) -> (i32, i32) {
    %c0_i32 = arith.constant 0 : i32
    %c0_i32_0 = arith.constant 0 : i32
    return %arg0, %c0_i32 : i32, i32
  }
  func.func @transform_2(%arg0: i32) -> (i32, i32) {
    %c0_i32 = arith.constant 0 : i32
    %c0_i32_0 = arith.constant 0 : i32
    return %c0_i32, %arg0 : i32, i32
  }
}

module attributes {stable_mosaic.version = 11 : i64} {
  func.func @_gem_kernel(%arg0: i32, %arg1: memref<1xf32, #tpu.memory_space<smem>>, %arg2: memref<8x256xf32, #tpu.memory_space<vmem>>, %arg3: memref<8x1xf32, #tpu.memory_space<vmem>>) attributes {dimension_semantics = [#tpu.dimension_semantics<parallel>], iteration_bounds = array<i64: 1>, scalar_prefetch = 0 : i64, scratch_operands = 0 : i64, tpu.core_type = #tpu.core_type<tc>, window_params = [{transform_indices = @transform_0, window_bounds = array<i64: 1>}, {transform_indices = @transform_1, window_bounds = array<i64: 8, 256>}, {transform_indices = @transform_2, window_bounds = array<i64: 8, 1>}]} {
    %c0 = arith.constant 0 : index
    %0 = memref.load %arg1[%c0] : memref<1xf32, #tpu.memory_space<smem>>
    %cst = arith.constant 1.000000e+00 : f32
    %1 = arith.divf %cst, %0 : f32
    %c0_0 = arith.constant 0 : index
    %c0_1 = arith.constant 0 : index
    %2 = vector.load %arg2[%c0_0, %c0_1] : memref<8x256xf32, #tpu.memory_space<vmem>>, vector<8x256xf32>
    %cst_2 = arith.constant 9.99999997E-7 : f32
    %3 = vector.broadcast %cst_2 : f32 to vector<8x256xf32>
    %4 = arith.maximumf %2, %3 : vector<8x256xf32>
    %5 = math.log %4 : vector<8x256xf32>
    %6 = vector.broadcast %0 : f32 to vector<8x256xf32>
    %7 = arith.mulf %5, %6 : vector<8x256xf32>
    %8 = math.exp %7 : vector<8x256xf32>
    %cst_3 = arith.constant dense<0.000000e+00> : vector<8xf32>
    %9 = vector.multi_reduction <add>, %8, %cst_3 [1] : vector<8x256xf32> to vector<8xf32>
    %10 = vector.shape_cast %9 : vector<8xf32> to vector<8x1xf32>
    %cst_4 = arith.constant 2.560000e+02 : f32
    %11 = vector.broadcast %cst_4 : f32 to vector<8x1xf32>
    %12 = arith.divf %10, %11 : vector<8x1xf32>
    %13 = math.log %12 : vector<8x1xf32>
    %14 = vector.broadcast %1 : f32 to vector<8x1xf32>
    %15 = arith.mulf %13, %14 : vector<8x1xf32>
    %16 = math.exp %15 : vector<8x1xf32>
    %c0_5 = arith.constant 0 : index
    %c0_6 = arith.constant 0 : index
    %17 = vector.load %arg3[%c0_5, %c0_6] : memref<8x1xf32, #tpu.memory_space<vmem>>, vector<8x1xf32>
    tpu.vector_store %arg3[%c0_5, %c0_6], %16 {strides = array<i32>} : memref<8x1xf32, #tpu.memory_space<vmem>>, vector<8x1xf32>,
    return
  }
  func.func @transform_0(%arg0: i32) -> i32 {
    %c0_i32 = arith.constant 0 : i32
    %c0_i32_0 = arith.constant 0 : i32
    return %c0_i32 : i32
  }
  func.func @transform_1(%arg0: i32) -> (i32, i32) {
    %c0_i32 = arith.constant 0 : i32
    %c0_i32_0 = arith.constant 0 : i32
    return %arg0, %c0_i32 : i32, i32
  }
  func.func @transform_2(%arg0: i32) -> (i32, i32) {
    %c0_i32 = arith.constant 0 : i32
    %c0_i32_0 = arith.constant 0 : i32
    return %arg0, %c0_i32 : i32, i32
  }
}

</mosaic_0001>

<llo_original>
// kernel: tpu_custom_call.1
$region0: #{tpu_custom_call.1}
  #allocation0 [shape = 'u32[]', space=smem, size = 0x4, offset = 0x4, fixed_abs, tag = 'smem constant byte address 0x4 - core index']
  #allocation1 [shape = 'u32[144,128]{1,0:T(1,128)}', space=vmem, size = 0x12000, scoped, tag = 'internal scratch']
  #allocation2 [shape = 'f32[1]{0:T(128)S(6)}', space=smem, size = 0x200, scoped, tag = 'scoped memory for tpu_custom_call.1']
  %s0 = inlined_call_operand.<no memory space> [shape: f32[1], index: 0, kind: input, shape index: {}]
  %s1 = inlined_call_operand.hbm [shape: f32[8,256], index: 1, kind: input, shape index: {}]
  %s2 = inlined_call_operand.hbm [shape: f32[1,8], index: 2, kind: output, shape index: {}]
  %s3 = sld [smem:[#allocation0]]
  $region22: #{tpu_custom_call.1} parent=0
    _
  %s5 = ssub.s32 1, %s3
  %s6 = scalar_select 0, %s5, %s3
  %7 = sst [smem:[#allocation2]] %s0
  $region1: #{tpu_custom_call.1} parent=0
    #allocation3 [shape = 'u8[8192]{0}', space=vmem, size = 0x2000, scoped, tag = 'input window, operand 1, single buffered']
    #allocation4 [shape = 's32[1]{0}', space=sflag, size = 0x4, scoped, tag = 'scoped memory for tpu_custom_call.1']
    #allocation5 [shape = 's32[1]{0}', space=sflag, size = 0x4, scoped, tag = 'scoped memory for tpu_custom_call.1']
    #allocation6 [shape = 'u8[512]{0}', space=vmem, size = 0x400, scoped, tag = 'output window, operand 0, single buffered']
    %8 = vsyncpa [#allocation4], 0
    %9 = vsyncpa [#allocation5], 0
    // Predicated region
    $region2: #{tpu_custom_call.1} parent=1 // pred_check
      _
    $region3: #{tpu_custom_call.1} parent=1 // pred_check_branch
      %11 = sbr.rel (0) target = $region5
    $region4: #{tpu_custom_call.1} parent=1 // pred_region
      _
    $region5: #{tpu_custom_call.1} parent=1 // pred_fallthru
      _
    // Predicated region
    $region6: #{tpu_custom_call.1} parent=1 // pred_check
      _
    $region7: #{tpu_custom_call.1} parent=1 // pred_check_branch
      %13 = sbr.rel (0) target = $region9
    $region8: #{tpu_custom_call.1} parent=1 // pred_region
      %s15 = ssub.s32 256, 256
      %16 = vsyncadd [#allocation4], %s15
      %s18 = sshll.u32 [#allocation3], 4
      %s19 = int_to_ptr.vmem [resolvable:$true] %s18
      %21 = dma.hbm_to_vmem [thread:$0]  %s1, 256, %s19, [#allocation4]
    $region9: #{tpu_custom_call.1} parent=1 // pred_fallthru
      _
    // Predicated region
    $region10: #{tpu_custom_call.1} parent=1 // pred_check
      _
    $region11: #{tpu_custom_call.1} parent=1 // pred_check_branch
      %23 = sbr.rel (0) target = $region13
    $region12: #{tpu_custom_call.1} parent=1 // pred_region
      %24 = dma.done [#allocation4], 256
    $region13: #{tpu_custom_call.1} parent=1 // pred_fallthru
      _
    %s25 = sld [smem:[#allocation2]]
    %v26 = vstv %s25
    %v27 = vrcp.pop %v26
    %s28 = vtos %v27
    %v29 = vld [vmem:[#allocation3] sm:$0xff]
    %v30 = vld [vmem:[#allocation3 + $0x8] sm:$0xff]
    %v31 = vmax.f32 %v29, 1e-06
    %v32 = vmax.f32 %v30, 1e-06
    %v33 = vlog2.pop %v31
    %v34 = vmul.f32 %v33, 0.6931472
    %v35 = vlog2.pop %v32
    %v36 = vmul.f32 %v35, 0.6931472
    %v37 = vstv %s25
    %v38 = vmul.f32 %v34, %v37
    %v39 = vmul.f32 %v36, %v37
    %v40 = vmul.f32 %v38, 1.442695
    %v41 = vpow.pop %v40
    %v42 = vmul.f32 %v39, 1.442695
    %v43 = vpow.pop %v42
    %v44 = vadd.f32 %v41, %v43
    %45 = vadd.xlane.f32.xlu0 %v44
    %v46 = vpop.xlane.xlu0 %45
    %v47 = vrcp.pop 256.0
    %v48 = vmul.f32 %v46, %v47
    %v49 = vlog2.pop %v48
    %v50 = vmul.f32 %v49, 0.6931472
    %v51 = vstv %s28
    %v52 = vmul.f32 %v50, %v51
    %v53 = vmul.f32 %v52, 1.442695
    %v54 = vpow.pop %v53
    %v56 = vlaneseq
    %v57 = vand.u32 %v56, 127
    %v58 = vlaneseq
    %v59 = vshrl.u32 %v58, 7
    %v60 = vsub.s32 %v57, %v59
    %v61 = vrot.slane %v54, %v60
    %vm63 = vcmask 57344
    %64 = vst.msk [vmem:[#allocation6] sm:$0x1] %vm63, %v61
    // Predicated region
    $region14: #{tpu_custom_call.1} parent=1 // pred_check
      _
    $region15: #{tpu_custom_call.1} parent=1 // pred_check_branch
      %66 = sbr.rel (0) target = $region17
    $region16: #{tpu_custom_call.1} parent=1 // pred_region
      %s68 = ssub.s32 16, 16
      %69 = vsyncadd [#allocation5], %s68
      %s71 = sshll.u32 [#allocation6], 4
      %s72 = int_to_ptr.vmem [resolvable:$true] %s71
      %74 = dma.vmem_to_hbm [thread:$0]  %s72, 16, %s2, [#allocation5]
    $region17: #{tpu_custom_call.1} parent=1 // pred_fallthru
      _
    // Predicated region
    $region18: #{tpu_custom_call.1} parent=1 // pred_check
      _
    $region19: #{tpu_custom_call.1} parent=1 // pred_check_branch
      %76 = sbr.rel (0) target = $region21
    $region20: #{tpu_custom_call.1} parent=1 // pred_region
      %77 = dma.done [#allocation5], 16
    $region21: #{tpu_custom_call.1} parent=1 // pred_fallthru
      _
    %78 = vsyncpa [#allocation4], 1
    %79 = vsyncpa [#allocation5], 1

// kernel: tpu_custom_call.1
$region0: #{tpu_custom_call.1}
  #allocation0 [shape = 'u32[]', space=smem, size = 0x4, offset = 0x4, fixed_abs, tag = 'smem constant byte address 0x4 - core index']
  #allocation1 [shape = 'u32[144,128]{1,0:T(1,128)}', space=vmem, size = 0x12000, scoped, tag = 'internal scratch']
  #allocation2 [shape = 'f32[1]{0:T(128)S(6)}', space=smem, size = 0x200, scoped, tag = 'scoped memory for tpu_custom_call.1']
  %s0 = inlined_call_operand.<no memory space> [shape: f32[1], index: 0, kind: input, shape index: {}]
  %s1 = inlined_call_operand.hbm [shape: f32[8,256], index: 1, kind: input, shape index: {}]
  %s2 = inlined_call_operand.vmem [shape: f32[8,1], index: 2, kind: output, shape index: {}]
  %s3 = sld [smem:[#allocation0]]
  $region22: #{tpu_custom_call.1} parent=0
    _
  %s5 = ssub.s32 1, %s3
  %s6 = scalar_select 0, %s5, %s3
  %7 = sst [smem:[#allocation2]] %s0
  $region1: #{tpu_custom_call.1} parent=0
    #allocation3 [shape = 'u8[8192]{0}', space=vmem, size = 0x2000, scoped, tag = 'input window, operand 1, single buffered']
    #allocation4 [shape = 's32[1]{0}', space=sflag, size = 0x4, scoped, tag = 'scoped memory for tpu_custom_call.1']
    %8 = vsyncpa [#allocation4], 0
    // Predicated region
    $region2: #{tpu_custom_call.1} parent=1 // pred_check
      _
    $region3: #{tpu_custom_call.1} parent=1 // pred_check_branch
      %10 = sbr.rel (0) target = $region5
    $region4: #{tpu_custom_call.1} parent=1 // pred_region
      _
    $region5: #{tpu_custom_call.1} parent=1 // pred_fallthru
      _
    // Predicated region
    $region6: #{tpu_custom_call.1} parent=1 // pred_check
      _
    $region7: #{tpu_custom_call.1} parent=1 // pred_check_branch
      %12 = sbr.rel (0) target = $region9
    $region8: #{tpu_custom_call.1} parent=1 // pred_region
      %s14 = ssub.s32 256, 256
      %15 = vsyncadd [#allocation4], %s14
      %s17 = sshll.u32 [#allocation3], 4
      %s18 = int_to_ptr.vmem [resolvable:$true] %s17
      %20 = dma.hbm_to_vmem [thread:$0]  %s1, 256, %s18, [#allocation4]
    $region9: #{tpu_custom_call.1} parent=1 // pred_fallthru
      _
    // Predicated region
    $region10: #{tpu_custom_call.1} parent=1 // pred_check
      _
    $region11: #{tpu_custom_call.1} parent=1 // pred_check_branch
      %22 = sbr.rel (0) target = $region13
    $region12: #{tpu_custom_call.1} parent=1 // pred_region
      %23 = dma.done [#allocation4], 256
    $region13: #{tpu_custom_call.1} parent=1 // pred_fallthru
      _
    %s24 = sld [smem:[#allocation2]]
    %v25 = vstv %s24
    %v26 = vrcp.pop %v25
    %s27 = vtos %v26
    %v28 = vld [vmem:[#allocation3] sm:$0xff]
    %v29 = vld [vmem:[#allocation3 + $0x8] sm:$0xff]
    %v30 = vmax.f32 %v28, 1e-06
    %v31 = vmax.f32 %v29, 1e-06
    %v32 = vlog2.pop %v30
    %v33 = vmul.f32 %v32, 0.6931472
    %v34 = vlog2.pop %v31
    %v35 = vmul.f32 %v34, 0.6931472
    %v36 = vstv %s24
    %v37 = vmul.f32 %v33, %v36
    %v38 = vmul.f32 %v35, %v36
    %v39 = vmul.f32 %v37, 1.442695
    %v40 = vpow.pop %v39
    %v41 = vmul.f32 %v38, 1.442695
    %v42 = vpow.pop %v41
    %v43 = vadd.f32 %v40, %v42
    %44 = vadd.xlane.f32.xlu0 %v43
    %v45 = vpop.xlane.xlu0 %44
    %v46 = vrcp.pop 256.0
    %v47 = vmul.f32 %v45, %v46
    %v48 = vlog2.pop %v47
    %v49 = vmul.f32 %v48, 0.6931472
    %v50 = vstv %s27
    %v51 = vmul.f32 %v49, %v50
    %v52 = vmul.f32 %v51, 1.442695
    %v53 = vpow.pop %v52
    %vm54 = vcmask 7168
    %55 = vst.msk [vmem:[%s2] sm:$0xff] %vm54, %v53
    // Predicated region
    $region14: #{tpu_custom_call.1} parent=1 // pred_check
      _
    $region15: #{tpu_custom_call.1} parent=1 // pred_check_branch
      %57 = sbr.rel (0) target = $region17
    $region16: #{tpu_custom_call.1} parent=1 // pred_region
      _
    $region17: #{tpu_custom_call.1} parent=1 // pred_fallthru
      _
    // Predicated region
    $region18: #{tpu_custom_call.1} parent=1 // pred_check
      _
    $region19: #{tpu_custom_call.1} parent=1 // pred_check_branch
      %59 = sbr.rel (0) target = $region21
    $region20: #{tpu_custom_call.1} parent=1 // pred_region
      _
    $region21: #{tpu_custom_call.1} parent=1 // pred_fallthru
      _
    %60 = vsyncpa [#allocation4], 1

</llo_original>
